<compile_context>
chip_gen: v7x
topology: tpu7x:2x2x1
jax: 0.10.0
libtpu: 0.0.40
codegen_flags: <defaults>
</compile_context>

<pallas_src>
import functools
import math

import jax
import jax.numpy as jnp
from jax.experimental import pallas as pl
from jax.experimental.pallas import tpu as pltpu


def _round_up(x, m):
    return (x + m - 1) // m * m


# Keep double-buffered tiles comfortably inside every generation's scoped VMEM
# default (v5e 16 MiB is raised explicitly via vmem_limit_bytes below).
_VMEM_TILE_BUDGET = 24 << 20


def _proto_matmul_kernel(x_ref, w_ref, o_ref):
    """One output tile: o = x_tile @ w_tile on the MXU (f32 accumulation).

    x_ref: [tm, D]   block in VMEM
    w_ref: [D, tn]   block in VMEM (weights pre-transposed at init)
    o_ref: [tm, tn]  block in VMEM (tn multiple of 256 or == Kp -> dense vst)
    """
    o_ref[...] = jnp.dot(
        x_ref[...], w_ref[...], preferred_element_type=jnp.float32
    ).astype(o_ref.dtype)


def _select_tiles(B, D, Kp, itemsize, budget=_VMEM_TILE_BUDGET):
    """Pick (tm, tn). Prefer W fully resident (tn == Kp) and the largest tm."""

    def cost(tm, tn):
        # x, W and out tiles, double-buffered by the Pallas pipeline.
        return 2 * (tm * D + D * tn + tm * tn) * itemsize

    b8 = _round_up(max(B, 1), 8)
    tm_opts = [t for t in (512, 256, 128) if t < b8]
    tm_opts.append(min(512, b8))
    tm_opts = sorted(set(tm_opts), reverse=True)

    # tn == Kp first (W-resident, 1-D grid), then large divisors of Kp.
    tn_opts = [Kp] + [t for t in (1024, 512, 256) if t < Kp and Kp % t == 0]

    for tn in tn_opts:
        for tm in tm_opts:
            if cost(tm, tn) <= budget:
                return tm, tn
    # Fallback: smallest legal tiles (Kp is always a multiple of 256).
    return min(128, b8), 256


@functools.partial(jax.jit, static_argnames=("tm", "tn", "head_sizes", "split"))
def _fused_heads_matmul(x, w_cat, *, tm, tn, head_sizes, split=True):
    """x:[B,D] (any float dtype) x w_cat:[D,Kp] -> per-head outputs (or fused)."""
    B, D = x.shape
    D2, Kp = w_cat.shape
    assert D == D2, (D, D2)
    dtype = w_cat.dtype
    itemsize = dtype.itemsize

    # Cast + pad inside the jit so they fuse with the pallas_call prologue.
    Bp = _round_up(B, tm)
    xp = x.astype(dtype)
    if Bp != B:
        xp = jnp.pad(xp, ((0, Bp - B), (0, 0)))

    if tn == Kp:
        # W fully resident in VMEM: 1-D grid over B tiles, W DMA'd only once.
        grid = (Bp // tm,)
        in_specs = [
            pl.BlockSpec((tm, D), lambda i: (i, 0)),
            pl.BlockSpec((D, Kp), lambda i: (0, 0)),
        ]
        out_specs = pl.BlockSpec((tm, Kp), lambda i: (i, 0))
        dim_sem = ("parallel",)
    else:
        # K outer / B inner: the W tile stays resident across the inner B
        # sweep; only the (smaller) x operand is re-streamed per K tile.
        grid = (Kp // tn, Bp // tm)
        in_specs = [
            pl.BlockSpec((tm, D), lambda j, i: (i, 0)),
            pl.BlockSpec((D, tn), lambda j, i: (0, j)),
        ]
        out_specs = pl.BlockSpec((tm, tn), lambda j, i: (i, j))
        dim_sem = ("parallel", "parallel")

    tile_bytes = 2 * (tm * D + D * tn + tm * tn) * itemsize  # double-buffered
    vmem_limit = int(min(max(tile_bytes + (8 << 20), 32 << 20), 48 << 20))

    cost = pl.CostEstimate(
        flops=2 * Bp * D * Kp,
        transcendentals=0,
        bytes_accessed=int(itemsize * (Bp * D + D * Kp + Bp * Kp)),
    )

    out = pl.pallas_call(
        _proto_matmul_kernel,
        out_shape=jax.ShapeDtypeStruct((Bp, Kp), dtype),
        grid=grid,
        in_specs=in_specs,
        out_specs=out_specs,
        compiler_params=pltpu.CompilerParams(
            dimension_semantics=dim_sem,
            vmem_limit_bytes=vmem_limit,
        ),
        cost_estimate=cost,
    )(xp, w_cat)

    k_total = sum(head_sizes)
    if not split:
        # Fused result (batch/lane padding stripped); caller slices per head
        # inside its own jit (e.g. fused with Sinkhorn / softmax).
        return out[:B, :k_total]

    # Per-head split inside the same jit, so the copies stay in one XLA
    # computation instead of separate un-jitted HBM passes.
    res = []
    off = 0
    for k in head_sizes:
        res.append(out[:B, off:off + k])
        off += k
    return res


class MultiPrototypes:
    """JAX/Pallas re-implementation of SwAV's MultiPrototypes module.

    All prototype heads are fused into a single matmul against a
    pre-concatenated, pre-transposed, lane-padded weight matrix.
    """

    def __init__(self, output_dim, nmb_prototypes, key, param_dtype=jnp.bfloat16):
        # bf16 is the production default (halves HBM traffic, doubles MXU
        # rate); pass param_dtype=jnp.float32 for exact parity with PyTorch.
        self.nmb_heads = len(nmb_prototypes)
        self.nmb_prototypes = list(nmb_prototypes)
        self.output_dim = output_dim
        self.param_dtype = param_dtype

        keys = jax.random.split(key, self.nmb_heads)
        bound = 1.0 / math.sqrt(output_dim)
        # Per-head weights in PyTorch nn.Linear layout [K_i, D] (kept for the
        # reference check / parameter export).
        self.weights = [
            jax.random.uniform(
                k, (n_proto, output_dim), dtype=jnp.float32,
                minval=-bound, maxval=bound,
            )
            for k, n_proto in zip(keys, nmb_prototypes)
        ]

        # One-time fusion: concat along K, transpose to [D, K_total], pad K to
        # a multiple of 256 (full-width v6e/v7x MXU, dense lane stores).
        self.k_total = sum(self.nmb_prototypes)
        self.kp = _round_up(self.k_total, 256)
        w_cat = jnp.concatenate(self.weights, axis=0).T  # [D, K_total]
        if self.kp > self.k_total:
            w_cat = jnp.pad(w_cat, ((0, 0), (0, self.kp - self.k_total)))
        self.w_cat = w_cat.astype(param_dtype)  # [D, Kp]

    def _tiles(self, B):
        return _select_tiles(
            B, self.output_dim, self.kp, jnp.dtype(self.param_dtype).itemsize
        )

    def __call__(self, x):
        B, D = x.shape
        assert D == self.output_dim, (D, self.output_dim)
        tm, tn = self._tiles(B)
        return _fused_heads_matmul(
            x, self.w_cat, tm=tm, tn=tn,
            head_sizes=tuple(self.nmb_prototypes), split=True,
        )

    def forward_fused(self, x):
        """Fused [B, K_total] output (no per-head slice copies) + head offsets."""
        B, D = x.shape
        assert D == self.output_dim, (D, self.output_dim)
        tm, tn = self._tiles(B)
        out = _fused_heads_matmul(
            x, self.w_cat, tm=tm, tn=tn,
            head_sizes=tuple(self.nmb_prototypes), split=False,
        )
        offsets = []
        off = 0
        for k in self.nmb_prototypes:
            offsets.append((off, k))
            off += k
        return out, offsets


if __name__ == "__main__":
    key = jax.random.PRNGKey(0)
    k_x, k_w = jax.random.split(key)

    B = 8            # batch
    D = 32           # output_dim (feature dim fed into the prototype heads)
    nmb_prototypes = [16, 24, 8]

    x = jax.random.normal(k_x, (B, D), dtype=jnp.float32)

    ok = True

    # f32 model: tight check against the per-head PyTorch-equivalent reference.
    model_f32 = MultiPrototypes(D, nmb_prototypes, k_w, param_dtype=jnp.float32)
    outs = [jax.block_until_ready(o) for o in model_f32(x)]
    for o, w, k in zip(outs, model_f32.weights, nmb_prototypes):
        ref = x @ w.T
        ok = ok and (o.shape == (B, k))
        ok = ok and bool(jnp.allclose(o, ref, atol=1e-5, rtol=1e-5))

    # bf16 model (production default): loose check against a bf16-cast reference.
    model_bf16 = MultiPrototypes(D, nmb_prototypes, k_w, param_dtype=jnp.bfloat16)
    outs16 = [jax.block_until_ready(o) for o in model_bf16(x)]
    for o, w, k in zip(outs16, model_bf16.weights, nmb_prototypes):
        ref = (x.astype(jnp.bfloat16).astype(jnp.float32)
               @ w.astype(jnp.bfloat16).astype(jnp.float32).T)
        ok = ok and (o.shape == (B, k))
        ok = ok and bool(
            jnp.allclose(o.astype(jnp.float32), ref, atol=5e-2, rtol=5e-2)
        )

    # Fused path sanity (no per-head slicing inside the kernel wrapper).
    fused, offsets = model_bf16.forward_fused(x)
    fused = jax.block_until_ready(fused)
    ok = ok and (fused.shape == (B, sum(nmb_prototypes)))

    print("KERNEL_OK" if ok else "MISMATCH")
</pallas_src>

<mosaic_0001>
module attributes {stable_mosaic.version = 11 : i64} {
  func.func @_proto_matmul_kernel(%arg0: i32, %arg1: memref<8x32xf32, #tpu.memory_space<vmem>>, %arg2: memref<32x256xf32, #tpu.memory_space<vmem>>, %arg3: memref<8x256xf32, #tpu.memory_space<vmem>>) attributes {dimension_semantics = [#tpu.dimension_semantics<parallel>], iteration_bounds = array<i64: 1>, scalar_prefetch = 0 : i64, scratch_operands = 0 : i64, tpu.core_type = #tpu.core_type<tc>, window_params = [{transform_indices = @transform_0, window_bounds = array<i64: 8, 32>}, {pipeline_mode = #tpu.pipeline_mode<synchronous>, transform_indices = @transform_1, window_bounds = array<i64: 32, 256>}, {transform_indices = @transform_2, window_bounds = array<i64: 8, 256>}]} {
    %c0 = arith.constant 0 : index
    %c0_0 = arith.constant 0 : index
    %0 = vector.load %arg1[%c0, %c0_0] : memref<8x32xf32, #tpu.memory_space<vmem>>, vector<8x32xf32>
    %c0_1 = arith.constant 0 : index
    %c0_2 = arith.constant 0 : index
    %1 = vector.load %arg2[%c0_1, %c0_2] : memref<32x256xf32, #tpu.memory_space<vmem>>, vector<32x256xf32>
    %cst = arith.constant dense<0.000000e+00> : vector<8x256xf32>
    %2 = tpu.matmul %0, %1, %cst {dimension_numbers = #tpu.dot_dimension_numbers<[1], [0], [0], [1], [0, 0, 1, 1], [], []>} : vector<8x32xf32>, vector<32x256xf32>, vector<8x256xf32> -> vector<8x256xf32>
    %c0_3 = arith.constant 0 : index
    %c0_4 = arith.constant 0 : index
    %3 = vector.load %arg3[%c0_3, %c0_4] : memref<8x256xf32, #tpu.memory_space<vmem>>, vector<8x256xf32>
    tpu.vector_store %arg3[%c0_3, %c0_4], %2 {strides = array<i32>} : memref<8x256xf32, #tpu.memory_space<vmem>>, vector<8x256xf32>,
    return
  }
  func.func @transform_0(%arg0: i32) -> (i32, i32) {
    %c0_i32 = arith.constant 0 : i32
    %c0_i32_0 = arith.constant 0 : i32
    return %arg0, %c0_i32 : i32, i32
  }
  func.func @transform_1(%arg0: i32) -> (i32, i32) {
    %c0_i32 = arith.constant 0 : i32
    %c0_i32_0 = arith.constant 0 : i32
    %c0_i32_1 = arith.constant 0 : i32
    return %c0_i32, %c0_i32_0 : i32, i32
  }
  func.func @transform_2(%arg0: i32) -> (i32, i32) {
    %c0_i32 = arith.constant 0 : i32
    %c0_i32_0 = arith.constant 0 : i32
    return %arg0, %c0_i32 : i32, i32
  }
}

</mosaic_0001>

<llo_original>
// kernel: _fused_heads_matmul.1
$region0: #{_fused_heads_matmul.1}
  #allocation0 [shape = 'u32[]', space=smem, size = 0x4, offset = 0x4, fixed_abs, tag = 'smem constant byte address 0x4 - core index']
  #allocation1 [shape = 'u32[144,128]{1,0:T(1,128)}', space=vmem, size = 0x12000, scoped, tag = 'internal scratch']
  %s0 = inlined_call_operand.hbm [shape: f32[8,32], index: 0, kind: input, shape index: {}]
  %s1 = inlined_call_operand.hbm [shape: f32[32,256], index: 1, kind: input, shape index: {}]
  %s2 = inlined_call_operand.vmem [shape: f32[8,256], index: 2, kind: output, shape index: {}]
  %s3 = sld [smem:[#allocation0]]
  $region26: #{_fused_heads_matmul.1} parent=0
    _
  %s5 = ssub.s32 1, %s3
  %s6 = scalar_select 0, %s5, %s3
  $region1: #{_fused_heads_matmul.1} parent=0
    #allocation2 [shape = 'u8[4096]{0}', space=vmem, size = 0x1000, scoped, tag = 'input window, operand 0, single buffered']
    #allocation3 [shape = 's32[1]{0}', space=sflag, size = 0x4, scoped, tag = 'scoped memory for _fused_heads_matmul.1']
    #allocation4 [shape = 'u8[32768]{0}', space=vmem, size = 0x8000, scoped, tag = 'input window, operand 1, single buffered']
    #allocation5 [shape = 's32[1]{0}', space=sflag, size = 0x4, scoped, tag = 'scoped memory for _fused_heads_matmul.1']
    %7 = vsyncpa [#allocation3], 0
    %8 = vsyncpa [#allocation5], 0
    // Predicated region
    $region2: #{_fused_heads_matmul.1} parent=1 // pred_check
      _
    $region3: #{_fused_heads_matmul.1} parent=1 // pred_check_branch
      %10 = sbr.rel (0) target = $region5
    $region4: #{_fused_heads_matmul.1} parent=1 // pred_region
      %s12 = ssub.s32 128, 128
      %13 = vsyncadd [#allocation3], %s12
      %s15 = sshll.u32 [#allocation2], 4
      %s16 = int_to_ptr.vmem [resolvable:$true] %s15
      %18 = dma.hbm_to_vmem [thread:$0]  %s0, 128, %s16, [#allocation3]
    $region5: #{_fused_heads_matmul.1} parent=1 // pred_fallthru
      _
    // Predicated region
    $region6: #{_fused_heads_matmul.1} parent=1 // pred_check
      _
    $region7: #{_fused_heads_matmul.1} parent=1 // pred_check_branch
      %20 = sbr.rel (0) target = $region9
    $region8: #{_fused_heads_matmul.1} parent=1 // pred_region
      %s22 = ssub.s32 1024, 1024
      %23 = vsyncadd [#allocation5], %s22
      %s24 = sshll.u32 [#allocation4], 4
      %s25 = int_to_ptr.vmem [resolvable:$true] %s24
      %30 = dma.hbm_to_vmem [thread:$0]  %s1, 1024, %s25, [#allocation5], 256, 256, 16
    $region9: #{_fused_heads_matmul.1} parent=1 // pred_fallthru
      _
    // Predicated region
    $region10: #{_fused_heads_matmul.1} parent=1 // pred_check
      _
    $region11: #{_fused_heads_matmul.1} parent=1 // pred_check_branch
      %32 = sbr.rel (0) target = $region13
    $region12: #{_fused_heads_matmul.1} parent=1 // pred_region
      %33 = dma.done [#allocation3], 128
    $region13: #{_fused_heads_matmul.1} parent=1 // pred_fallthru
      _
    // Predicated region
    $region14: #{_fused_heads_matmul.1} parent=1 // pred_check
      _
    $region15: #{_fused_heads_matmul.1} parent=1 // pred_check_branch
      %35 = sbr.rel (0) target = $region17
    $region16: #{_fused_heads_matmul.1} parent=1 // pred_region
      %36 = dma.done [#allocation5], 1024
    $region17: #{_fused_heads_matmul.1} parent=1 // pred_fallthru
      _
    %v37 = vld [vmem:[#allocation2] sm:$0xff]
    %v38 = vld [vmem:[#allocation4] sm:$0xff]
    %v39 = vld [vmem:[#allocation4 + $0x8] sm:$0xff]
    %v40 = vld [vmem:[#allocation4 + $0x10] sm:$0xff]
    %v41 = vld [vmem:[#allocation4 + $0x18] sm:$0xff]
    %v42 = vld [vmem:[#allocation4 + $0x20] sm:$0xff]
    %v43 = vld [vmem:[#allocation4 + $0x28] sm:$0xff]
    %v44 = vld [vmem:[#allocation4 + $0x30] sm:$0xff]
    %v45 = vld [vmem:[#allocation4 + $0x38] sm:$0xff]
    %vm46 = vcmask 261120
    %v48 = vsel %vm46, %v37, 0
    %50 = vmatprep.subr.mxu0 %v39
    %51 = vmatpush1.msra.mxu0 %v38
    %52 = vmatprep.subr.mxu0 %v41
    %53 = vmatpush1.msra.mxu0 %v40
    %54 = vmatprep.subr.mxu0 %v43
    %55 = vmatpush1.msra.mxu0 %v42
    %56 = vmatprep.subr.mxu0 %v45
    %57 = vmatpush1.msra.mxu0 %v44
    %58 = vmatprep.subr.mxu0 0.0
    %59 = vmatpush1.msra.mxu0 0.0
    %60 = vmatprep.subr.mxu0 0.0
    %61 = vmatpush1.msra.mxu0 0.0
    %62 = vmatprep.subr.mxu0 0.0
    %63 = vmatpush1.msra.mxu0 0.0
    %64 = vmatprep.subr.mxu0 0.0
    %65 = vmatpush1.msra.mxu0 0.0
    %66 = vmatprep.subr.mxu0 0.0
    %67 = vmatpush1.msra.mxu0 0.0
    %68 = vmatprep.subr.mxu0 0.0
    %69 = vmatpush1.msra.mxu0 0.0
    %70 = vmatprep.subr.mxu0 0.0
    %71 = vmatpush1.msra.mxu0 0.0
    %72 = vmatprep.subr.mxu0 0.0
    %73 = vmatpush1.msra.mxu0 0.0
    %74 = vmatprep.subr.mxu0 0.0
    %75 = vmatpush1.msra.mxu0 0.0
    %76 = vmatprep.subr.mxu0 0.0
    %77 = vmatpush1.msra.mxu0 0.0
    %78 = vmatprep.subr.mxu0 0.0
    %79 = vmatpush1.msra.mxu0 0.0
    %80 = vmatprep.subr.mxu0 0.0
    %81 = vmatpush1.msra.mxu0 0.0
    %82 = vmatprep.subr.mxu0 0.0
    %83 = vmatpush1.msra.mxu0 0.0
    %84 = vmatprep.subr.mxu0 0.0
    %85 = vmatpush1.msra.mxu0 0.0
    %86 = vmatprep.subr.mxu0 0.0
    %87 = vmatpush1.msra.mxu0 0.0
    %88 = vmatprep.subr.mxu0 0.0
    %89 = vmatpush1.msra.mxu0 0.0
    %90 = vmatprep.subr.mxu0 0.0
    %91 = vmatpush1.msra.mxu0 0.0
    %92 = vmatprep.subr.mxu0 0.0
    %93 = vmatpush1.msra.mxu0 0.0
    %94 = vmatprep.subr.mxu0 0.0
    %95 = vmatpush1.msra.mxu0 0.0
    %96 = vmatprep.subr.mxu0 0.0
    %97 = vmatpush1.msra.mxu0 0.0
    %98 = vmatprep.subr.mxu0 0.0
    %99 = vmatpush1.msra.mxu0 0.0
    %100 = vmatprep.subr.mxu0 0.0
    %101 = vmatpush1.msra.mxu0 0.0
    %102 = vmatprep.subr.mxu0 0.0
    %103 = vmatpush1.msra.mxu0 0.0
    %104 = vmatprep.subr.mxu0 0.0
    %105 = vmatpush1.msra.mxu0 0.0
    %106 = vmatprep.subr.mxu0 0.0
    %107 = vmatpush1.msra.mxu0 0.0
    %108 = vmatprep.subr.mxu0 0.0
    %109 = vmatpush1.msra.mxu0 0.0
    %110 = vmatprep.subr.mxu0 0.0
    %111 = vmatpush1.msra.mxu0 0.0
    %112 = vmatprep.subr.mxu0 0.0
    %113 = vmatpush1.msra.mxu0 0.0
    %114 = vmatprep.mubr.f32.mxu0 0.0
    %115 = vmatmul.mubr.f32.gmra.mrb[0].mxu0 %v48
    %v116 = vpop.f32.mrb[0].mxu0
    %v117 = vadd.f32 0.0, %v116
    %v118 = vpop.f32.mrb[0].mxu0
    %v119 = vadd.f32 0.0, %v118
    %120 = vdwg.mxu0
    %121 = vst [vmem:[%s2] sm:$0xff] %v117
    %122 = vst [vmem:[%s2 + $0x8] sm:$0xff] %v119
    // Predicated region
    $region18: #{_fused_heads_matmul.1} parent=1 // pred_check
      _
    $region19: #{_fused_heads_matmul.1} parent=1 // pred_check_branch
      %124 = sbr.rel (0) target = $region21
    $region20: #{_fused_heads_matmul.1} parent=1 // pred_region
      _
    $region21: #{_fused_heads_matmul.1} parent=1 // pred_fallthru
      _
    // Predicated region
    $region22: #{_fused_heads_matmul.1} parent=1 // pred_check
      _
    $region23: #{_fused_heads_matmul.1} parent=1 // pred_check_branch
      %126 = sbr.rel (0) target = $region25
    $region24: #{_fused_heads_matmul.1} parent=1 // pred_region
      _
    $region25: #{_fused_heads_matmul.1} parent=1 // pred_fallthru
      _
    %127 = vsyncpa [#allocation3], 1
    %128 = vsyncpa [#allocation5], 1

</llo_original>
